<compile_context>
chip_gen: v7x
topology: tpu7x:2x2x1
jax: 0.10.0
libtpu: 0.0.40
codegen_flags: <defaults>
</compile_context>

<pallas_src>
import functools

import jax
import jax.numpy as jnp
from jax.experimental import pallas as pl
from jax.experimental.pallas import tpu as pltpu


# -----------------------------------------------------------------------------
# Model configuration (all blocks share the same architecture so their weights
# can be stacked along a leading "block" axis).
# -----------------------------------------------------------------------------
BATCH = 4
BACKCAST_LEN = 16
FORECAST_LEN = 8
HIDDEN_DIMS = [32, 64]
THETA_F_DIM = 8
THETA_B_DIM = 8
NUM_STACKS = 2
BLOCKS_PER_STACK = 2
NUM_BLOCKS = NUM_STACKS * BLOCKS_PER_STACK      # flat loop == stacks of blocks

FC_DIMS = [BACKCAST_LEN] + HIDDEN_DIMS          # [16, 32, 64]
N_FC = len(FC_DIMS) - 1

SUBLANE = 8                                     # f32 sublane granularity
DEFAULT_BATCH_TILE = 256                        # rows per grid step at scale


def _round_up(n, m):
    return ((n + m - 1) // m) * m


# -----------------------------------------------------------------------------
# Kernel: one (batch_tile, ...) slab of the full NBEATS forward per grid step.
# -----------------------------------------------------------------------------
def _nbeats_kernel(n_fc, num_blocks, *refs):
    # refs layout:
    #   inputs : x, x_mask, y_mask               (batch-tiled)
    #            (W_i, b_i) for each fc layer    (stacked over blocks, resident)
    #            W_comb, b_comb                  (fused theta∘basis projection)
    #   outputs: forecast                         (batch-tiled)
    x_ref, xm_ref, ym_ref = refs[0], refs[1], refs[2]
    n_in = 3 + 2 * n_fc + 2
    params = refs[3:n_in]
    fcast_ref = refs[n_in]

    xm = xm_ref[...]
    ym = ym_ref[...]
    resid = x_ref[...]                          # f32
    fcast = jnp.zeros_like(ym)                  # f32

    for k in range(num_blocks):                 # static, fully unrolled
        h = resid
        for i in range(n_fc):
            W = params[2 * i][k]                # bf16 (din, dout), static slice
            b = params[2 * i + 1][k]            # f32  (1, dout)
            h = jnp.maximum(
                jnp.dot(h.astype(jnp.bfloat16), W,
                        preferred_element_type=jnp.float32) + b, 0.0)

        Wc = params[2 * n_fc][k]                # bf16 (H, F+B)  == Wt @ Wb
        bc = params[2 * n_fc + 1][k]            # f32  (1, F+B)  == bt @ Wb + bb

        # fused (theta ∘ basis) projection: [forecast | backcast]
        fb = jnp.dot(h.astype(jnp.bfloat16), Wc,
                     preferred_element_type=jnp.float32) + bc

        # Block.forward with masks + Stack/NBEATS accumulation:
        fcast = fcast + fb[:, :FORECAST_LEN] * ym
        resid = resid - fb[:, FORECAST_LEN:] * xm

    fcast_ref[...] = fcast


# -----------------------------------------------------------------------------
# One-time parameter fusion (run at model-load time, NOT per forward call).
# Composes the two linear layers (theta projection -> basis projection) into a
# single (H, F+B) matrix per block and quantizes matmul operands to bf16.
# -----------------------------------------------------------------------------
def pack_params(params):
    packed = []
    for i in range(N_FC):
        packed.append(params[2 * i].astype(jnp.bfloat16))        # W   (NB,d,d')
        packed.append(params[2 * i + 1].astype(jnp.float32))     # b   (NB,1,d')

    Wtf, btf, Wtb, btb, Wbf, bbf, Wbb, bbb = params[2 * N_FC:]

    # Exact composition (both maps are linear, no nonlinearity between them).
    Wcomb = jnp.concatenate([
        jnp.einsum("kht,ktf->khf", Wtf, Wbf),                    # forecast part
        jnp.einsum("kht,ktc->khc", Wtb, Wbb),                    # backcast part
    ], axis=-1)                                                  # (NB, H, F+B)
    bcomb = jnp.concatenate([
        jnp.einsum("kit,ktf->kif", btf, Wbf) + bbf,
        jnp.einsum("kit,ktc->kic", btb, Wbb) + bbb,
    ], axis=-1)                                                  # (NB, 1, F+B)

    packed.append(Wcomb.astype(jnp.bfloat16))
    packed.append(bcomb.astype(jnp.float32))
    return packed


# -----------------------------------------------------------------------------
# Forward wrapper: batch-gridded pallas_call with VMEM-resident weights.
# -----------------------------------------------------------------------------
@functools.partial(jax.jit, static_argnames=("batch_tile",))
def nbeats_pallas(x, x_mask, y_mask, packed, batch_tile=DEFAULT_BATCH_TILE):
    B = x.shape[0]
    tm = min(batch_tile, _round_up(B, SUBLANE))  # tile rows (multiple of 8)
    B_pad = _round_up(B, tm)
    if B_pad != B:
        pad = ((0, B_pad - B), (0, 0))
        x = jnp.pad(x, pad)
        x_mask = jnp.pad(x_mask, pad)
        y_mask = jnp.pad(y_mask, pad)

    def tile(cols):
        return pl.BlockSpec((tm, cols), lambda i: (i, 0))

    # Whole-array weight specs whose index_map never changes -> not re-DMA'd
    # per grid step; they stay resident in VMEM.
    resident = [pl.BlockSpec(p.shape, lambda i: (0, 0, 0)) for p in packed]

    kernel = functools.partial(_nbeats_kernel, N_FC, NUM_BLOCKS)
    out = pl.pallas_call(
        kernel,
        out_shape=jax.ShapeDtypeStruct((B_pad, FORECAST_LEN), jnp.float32),
        grid=(B_pad // tm,),
        in_specs=[tile(BACKCAST_LEN), tile(BACKCAST_LEN), tile(FORECAST_LEN)]
                 + resident,
        out_specs=tile(FORECAST_LEN),
        compiler_params=pltpu.CompilerParams(
            dimension_semantics=("parallel",)),   # both TCs on v7x
    )(x, x_mask, y_mask, *packed)
    return out[:B]


# -----------------------------------------------------------------------------
# Deterministic raw parameter init (matches Block.__init__ shapes, stacked
# across NUM_BLOCKS identical blocks).
# -----------------------------------------------------------------------------
def init_params(key, scale=0.2):
    params = []

    def draw(k, shape):
        return scale * jax.random.normal(k, shape, jnp.float32)

    for i in range(N_FC):
        key, k1, k2 = jax.random.split(key, 3)
        params.append(draw(k1, (NUM_BLOCKS, FC_DIMS[i], FC_DIMS[i + 1])))
        params.append(draw(k2, (NUM_BLOCKS, 1, FC_DIMS[i + 1])))

    shapes = [
        (FC_DIMS[-1], THETA_F_DIM), (1, THETA_F_DIM),
        (FC_DIMS[-1], THETA_B_DIM), (1, THETA_B_DIM),
        (THETA_F_DIM, FORECAST_LEN), (1, FORECAST_LEN),
        (THETA_B_DIM, BACKCAST_LEN), (1, BACKCAST_LEN),
    ]
    for s in shapes:
        key, k1 = jax.random.split(key)
        params.append(draw(k1, (NUM_BLOCKS,) + s))
    return params


# -----------------------------------------------------------------------------
# Pure-JAX f32 reference (mirrors the PyTorch NBEATS/Stack/Block forward
# exactly, using the raw, un-fused parameters).
# -----------------------------------------------------------------------------
def nbeats_reference(x, x_mask, y_mask, params):
    forecast = jnp.zeros((x.shape[0], FORECAST_LEN), jnp.float32)
    for blk in range(NUM_BLOCKS):
        h = x
        for i in range(N_FC):
            W = params[2 * i][blk]
            b = params[2 * i + 1][blk][0]
            h = jnp.maximum(h @ W + b, 0.0)
        Wtf, btf, Wtb, btb, Wbf, bbf, Wbb, bbb = [params[2 * N_FC + j][blk]
                                                  for j in range(8)]
        theta_f = h @ Wtf + btf[0]
        theta_b = h @ Wtb + btb[0]
        f = theta_f @ Wbf + bbf[0]
        bc = theta_b @ Wbb + bbb[0]
        forecast = forecast + f * y_mask
        x = x - bc * x_mask
    return forecast


if __name__ == "__main__":
    key = jax.random.PRNGKey(0)
    key, kx, kxm, kym, kp = jax.random.split(key, 5)

    x = jax.random.normal(kx, (BATCH, BACKCAST_LEN), jnp.float32)
    # binary masks like the PyTorch module would receive
    x_mask = (jax.random.uniform(kxm, (BATCH, BACKCAST_LEN)) > 0.2).astype(jnp.float32)
    y_mask = (jax.random.uniform(kym, (BATCH, FORECAST_LEN)) > 0.2).astype(jnp.float32)

    raw_params = init_params(kp)
    packed = pack_params(raw_params)           # hoisted: done once at load time

    out = nbeats_pallas(x, x_mask, y_mask, packed)
    out = jax.block_until_ready(out)

    ref = nbeats_reference(x, x_mask, y_mask, raw_params)

    assert out.shape == (BATCH, FORECAST_LEN)
    assert jnp.all(jnp.isfinite(out))
    # bf16 matmul operands + composed theta/basis change the rounding order;
    # validate against the exact f32 reference with a modest tolerance.
    assert jnp.allclose(out, ref, rtol=5e-2, atol=5e-2), (
        f"mismatch: max abs diff {jnp.max(jnp.abs(out - ref))}")

    print("KERNEL_OK")
</pallas_src>

<mosaic_0001>
module attributes {stable_mosaic.version = 11 : i64} {
  func.func @_nbeats_kernel(%arg0: i32, %arg1: memref<8x16xf32, #tpu.memory_space<vmem>>, %arg2: memref<8x16xf32, #tpu.memory_space<vmem>>, %arg3: memref<8x8xf32, #tpu.memory_space<vmem>>, %arg4: memref<4x16x32xbf16, #tpu.memory_space<vmem>>, %arg5: memref<4x1x32xf32, #tpu.memory_space<vmem>>, %arg6: memref<4x32x64xbf16, #tpu.memory_space<vmem>>, %arg7: memref<4x1x64xf32, #tpu.memory_space<vmem>>, %arg8: memref<4x64x24xbf16, #tpu.memory_space<vmem>>, %arg9: memref<4x1x24xf32, #tpu.memory_space<vmem>>, %arg10: memref<8x8xf32, #tpu.memory_space<vmem>>) attributes {dimension_semantics = [#tpu.dimension_semantics<parallel>], iteration_bounds = array<i64: 1>, scalar_prefetch = 0 : i64, scratch_operands = 0 : i64, tpu.core_type = #tpu.core_type<tc>, window_params = [{transform_indices = @transform_0, window_bounds = array<i64: 8, 16>}, {transform_indices = @transform_1, window_bounds = array<i64: 8, 16>}, {transform_indices = @transform_2, window_bounds = array<i64: 8, 8>}, {pipeline_mode = #tpu.pipeline_mode<synchronous>, transform_indices = @transform_3, window_bounds = array<i64: 4, 16, 32>}, {pipeline_mode = #tpu.pipeline_mode<synchronous>, transform_indices = @transform_4, window_bounds = array<i64: 4, 1, 32>}, {pipeline_mode = #tpu.pipeline_mode<synchronous>, transform_indices = @transform_5, window_bounds = array<i64: 4, 32, 64>}, {pipeline_mode = #tpu.pipeline_mode<synchronous>, transform_indices = @transform_6, window_bounds = array<i64: 4, 1, 64>}, {pipeline_mode = #tpu.pipeline_mode<synchronous>, transform_indices = @transform_7, window_bounds = array<i64: 4, 64, 24>}, {pipeline_mode = #tpu.pipeline_mode<synchronous>, transform_indices = @transform_8, window_bounds = array<i64: 4, 1, 24>}, {transform_indices = @transform_9, window_bounds = array<i64: 8, 8>}]} {
    %c0 = arith.constant 0 : index
    %c0_0 = arith.constant 0 : index
    %0 = vector.load %arg2[%c0, %c0_0] : memref<8x16xf32, #tpu.memory_space<vmem>>, vector<8x16xf32>
    %c0_1 = arith.constant 0 : index
    %c0_2 = arith.constant 0 : index
    %1 = vector.load %arg3[%c0_1, %c0_2] : memref<8x8xf32, #tpu.memory_space<vmem>>, vector<8x8xf32>
    %c0_3 = arith.constant 0 : index
    %c0_4 = arith.constant 0 : index
    %2 = vector.load %arg1[%c0_3, %c0_4] : memref<8x16xf32, #tpu.memory_space<vmem>>, vector<8x16xf32>
    %cst = arith.constant 0.000000e+00 : f32
    %3 = vector.broadcast %cst : f32 to vector<8x8xf32>
    %c0_5 = arith.constant 0 : index
    %c0_6 = arith.constant 0 : index
    %c0_7 = arith.constant 0 : index
    %4 = vector.load %arg4[%c0_5, %c0_6, %c0_7] : memref<4x16x32xbf16, #tpu.memory_space<vmem>>, vector<1x16x32xbf16>
    %5 = vector.shape_cast %4 : vector<1x16x32xbf16> to vector<16x32xbf16>
    %c0_8 = arith.constant 0 : index
    %c0_9 = arith.constant 0 : index
    %c0_10 = arith.constant 0 : index
    %6 = vector.load %arg5[%c0_8, %c0_9, %c0_10] : memref<4x1x32xf32, #tpu.memory_space<vmem>>, vector<1x1x32xf32>
    %7 = vector.shape_cast %6 : vector<1x1x32xf32> to vector<1x32xf32>
    %8 = arith.truncf %2 : vector<8x16xf32> to vector<8x16xbf16>
    %cst_11 = arith.constant dense<0.000000e+00> : vector<8x32xf32>
    %9 = tpu.matmul %8, %5, %cst_11 {dimension_numbers = #tpu.dot_dimension_numbers<[1], [0], [0], [1], [0, 0, 1, 1], [], []>} : vector<8x16xbf16>, vector<16x32xbf16>, vector<8x32xf32> -> vector<8x32xf32>
    %10 = vector.broadcast %7 : vector<1x32xf32> to vector<8x32xf32>
    %11 = arith.addf %9, %10 : vector<8x32xf32>
    %cst_12 = arith.constant 0.000000e+00 : f32
    %12 = vector.broadcast %cst_12 : f32 to vector<8x32xf32>
    %13 = arith.maximumf %11, %12 : vector<8x32xf32>
    %c0_13 = arith.constant 0 : index
    %c0_14 = arith.constant 0 : index
    %c0_15 = arith.constant 0 : index
    %14 = vector.load %arg6[%c0_13, %c0_14, %c0_15] : memref<4x32x64xbf16, #tpu.memory_space<vmem>>, vector<1x32x64xbf16>
    %15 = vector.shape_cast %14 : vector<1x32x64xbf16> to vector<32x64xbf16>
    %c0_16 = arith.constant 0 : index
    %c0_17 = arith.constant 0 : index
    %c0_18 = arith.constant 0 : index
    %16 = vector.load %arg7[%c0_16, %c0_17, %c0_18] : memref<4x1x64xf32, #tpu.memory_space<vmem>>, vector<1x1x64xf32>
    %17 = vector.shape_cast %16 : vector<1x1x64xf32> to vector<1x64xf32>
    %18 = arith.truncf %13 : vector<8x32xf32> to vector<8x32xbf16>
    %cst_19 = arith.constant dense<0.000000e+00> : vector<8x64xf32>
    %19 = tpu.matmul %18, %15, %cst_19 {dimension_numbers = #tpu.dot_dimension_numbers<[1], [0], [0], [1], [0, 0, 1, 1], [], []>} : vector<8x32xbf16>, vector<32x64xbf16>, vector<8x64xf32> -> vector<8x64xf32>
    %20 = vector.broadcast %17 : vector<1x64xf32> to vector<8x64xf32>
    %21 = arith.addf %19, %20 : vector<8x64xf32>
    %cst_20 = arith.constant 0.000000e+00 : f32
    %22 = vector.broadcast %cst_20 : f32 to vector<8x64xf32>
    %23 = arith.maximumf %21, %22 : vector<8x64xf32>
    %c0_21 = arith.constant 0 : index
    %c0_22 = arith.constant 0 : index
    %c0_23 = arith.constant 0 : index
    %24 = vector.load %arg8[%c0_21, %c0_22, %c0_23] : memref<4x64x24xbf16, #tpu.memory_space<vmem>>, vector<1x64x24xbf16>
    %25 = vector.shape_cast %24 : vector<1x64x24xbf16> to vector<64x24xbf16>
    %c0_24 = arith.constant 0 : index
    %c0_25 = arith.constant 0 : index
    %c0_26 = arith.constant 0 : index
    %26 = vector.load %arg9[%c0_24, %c0_25, %c0_26] : memref<4x1x24xf32, #tpu.memory_space<vmem>>, vector<1x1x24xf32>
    %27 = vector.shape_cast %26 : vector<1x1x24xf32> to vector<1x24xf32>
    %28 = arith.truncf %23 : vector<8x64xf32> to vector<8x64xbf16>
    %cst_27 = arith.constant dense<0.000000e+00> : vector<8x24xf32>
    %29 = tpu.matmul %28, %25, %cst_27 {dimension_numbers = #tpu.dot_dimension_numbers<[1], [0], [0], [1], [0, 0, 1, 1], [], []>} : vector<8x64xbf16>, vector<64x24xbf16>, vector<8x24xf32> -> vector<8x24xf32>
    %30 = vector.broadcast %27 : vector<1x24xf32> to vector<8x24xf32>
    %31 = arith.addf %29, %30 : vector<8x24xf32>
    %32 = vector.extract_strided_slice %31 {offsets = [0, 0], sizes = [8, 8], strides = [1, 1]} : vector<8x24xf32> to vector<8x8xf32>
    %33 = arith.mulf %32, %1 : vector<8x8xf32>
    %34 = arith.addf %3, %33 : vector<8x8xf32>
    %35 = vector.extract_strided_slice %31 {offsets = [0, 8], sizes = [8, 16], strides = [1, 1]} : vector<8x24xf32> to vector<8x16xf32>
    %36 = arith.mulf %35, %0 : vector<8x16xf32>
    %37 = arith.subf %2, %36 : vector<8x16xf32>
    %c1 = arith.constant 1 : index
    %c0_28 = arith.constant 0 : index
    %c0_29 = arith.constant 0 : index
    %38 = vector.load %arg4[%c1, %c0_28, %c0_29] : memref<4x16x32xbf16, #tpu.memory_space<vmem>>, vector<1x16x32xbf16>
    %39 = vector.shape_cast %38 : vector<1x16x32xbf16> to vector<16x32xbf16>
    %c1_30 = arith.constant 1 : index
    %c0_31 = arith.constant 0 : index
    %c0_32 = arith.constant 0 : index
    %40 = vector.load %arg5[%c1_30, %c0_31, %c0_32] : memref<4x1x32xf32, #tpu.memory_space<vmem>>, vector<1x1x32xf32>
    %41 = vector.shape_cast %40 : vector<1x1x32xf32> to vector<1x32xf32>
    %42 = arith.truncf %37 : vector<8x16xf32> to vector<8x16xbf16>
    %cst_33 = arith.constant dense<0.000000e+00> : vector<8x32xf32>
    %43 = tpu.matmul %42, %39, %cst_33 {dimension_numbers = #tpu.dot_dimension_numbers<[1], [0], [0], [1], [0, 0, 1, 1], [], []>} : vector<8x16xbf16>, vector<16x32xbf16>, vector<8x32xf32> -> vector<8x32xf32>
    %44 = vector.broadcast %41 : vector<1x32xf32> to vector<8x32xf32>
    %45 = arith.addf %43, %44 : vector<8x32xf32>
    %cst_34 = arith.constant 0.000000e+00 : f32
    %46 = vector.broadcast %cst_34 : f32 to vector<8x32xf32>
    %47 = arith.maximumf %45, %46 : vector<8x32xf32>
    %c1_35 = arith.constant 1 : index
    %c0_36 = arith.constant 0 : index
    %c0_37 = arith.constant 0 : index
    %48 = vector.load %arg6[%c1_35, %c0_36, %c0_37] : memref<4x32x64xbf16, #tpu.memory_space<vmem>>, vector<1x32x64xbf16>
    %49 = vector.shape_cast %48 : vector<1x32x64xbf16> to vector<32x64xbf16>
    %c1_38 = arith.constant 1 : index
    %c0_39 = arith.constant 0 : index
    %c0_40 = arith.constant 0 : index
    %50 = vector.load %arg7[%c1_38, %c0_39, %c0_40] : memref<4x1x64xf32, #tpu.memory_space<vmem>>, vector<1x1x64xf32>
    %51 = vector.shape_cast %50 : vector<1x1x64xf32> to vector<1x64xf32>
    %52 = arith.truncf %47 : vector<8x32xf32> to vector<8x32xbf16>
    %cst_41 = arith.constant dense<0.000000e+00> : vector<8x64xf32>
    %53 = tpu.matmul %52, %49, %cst_41 {dimension_numbers = #tpu.dot_dimension_numbers<[1], [0], [0], [1], [0, 0, 1, 1], [], []>} : vector<8x32xbf16>, vector<32x64xbf16>, vector<8x64xf32> -> vector<8x64xf32>
    %54 = vector.broadcast %51 : vector<1x64xf32> to vector<8x64xf32>
    %55 = arith.addf %53, %54 : vector<8x64xf32>
    %cst_42 = arith.constant 0.000000e+00 : f32
    %56 = vector.broadcast %cst_42 : f32 to vector<8x64xf32>
    %57 = arith.maximumf %55, %56 : vector<8x64xf32>
    %c1_43 = arith.constant 1 : index
    %c0_44 = arith.constant 0 : index
    %c0_45 = arith.constant 0 : index
    %58 = vector.load %arg8[%c1_43, %c0_44, %c0_45] : memref<4x64x24xbf16, #tpu.memory_space<vmem>>, vector<1x64x24xbf16>
    %59 = vector.shape_cast %58 : vector<1x64x24xbf16> to vector<64x24xbf16>
    %c1_46 = arith.constant 1 : index
    %c0_47 = arith.constant 0 : index
    %c0_48 = arith.constant 0 : index
    %60 = vector.load %arg9[%c1_46, %c0_47, %c0_48] : memref<4x1x24xf32, #tpu.memory_space<vmem>>, vector<1x1x24xf32>
    %61 = vector.shape_cast %60 : vector<1x1x24xf32> to vector<1x24xf32>
    %62 = arith.truncf %57 : vector<8x64xf32> to vector<8x64xbf16>
    %cst_49 = arith.constant dense<0.000000e+00> : vector<8x24xf32>
    %63 = tpu.matmul %62, %59, %cst_49 {dimension_numbers = #tpu.dot_dimension_numbers<[1], [0], [0], [1], [0, 0, 1, 1], [], []>} : vector<8x64xbf16>, vector<64x24xbf16>, vector<8x24xf32> -> vector<8x24xf32>
    %64 = vector.broadcast %61 : vector<1x24xf32> to vector<8x24xf32>
    %65 = arith.addf %63, %64 : vector<8x24xf32>
    %66 = vector.extract_strided_slice %65 {offsets = [0, 0], sizes = [8, 8], strides = [1, 1]} : vector<8x24xf32> to vector<8x8xf32>
    %67 = arith.mulf %66, %1 : vector<8x8xf32>
    %68 = arith.addf %34, %67 : vector<8x8xf32>
    %69 = vector.extract_strided_slice %65 {offsets = [0, 8], sizes = [8, 16], strides = [1, 1]} : vector<8x24xf32> to vector<8x16xf32>
    %70 = arith.mulf %69, %0 : vector<8x16xf32>
    %71 = arith.subf %37, %70 : vector<8x16xf32>
    %c2 = arith.constant 2 : index
    %c0_50 = arith.constant 0 : index
    %c0_51 = arith.constant 0 : index
    %72 = vector.load %arg4[%c2, %c0_50, %c0_51] : memref<4x16x32xbf16, #tpu.memory_space<vmem>>, vector<1x16x32xbf16>
    %73 = vector.shape_cast %72 : vector<1x16x32xbf16> to vector<16x32xbf16>
    %c2_52 = arith.constant 2 : index
    %c0_53 = arith.constant 0 : index
    %c0_54 = arith.constant 0 : index
    %74 = vector.load %arg5[%c2_52, %c0_53, %c0_54] : memref<4x1x32xf32, #tpu.memory_space<vmem>>, vector<1x1x32xf32>
    %75 = vector.shape_cast %74 : vector<1x1x32xf32> to vector<1x32xf32>
    %76 = arith.truncf %71 : vector<8x16xf32> to vector<8x16xbf16>
    %cst_55 = arith.constant dense<0.000000e+00> : vector<8x32xf32>
    %77 = tpu.matmul %76, %73, %cst_55 {dimension_numbers = #tpu.dot_dimension_numbers<[1], [0], [0], [1], [0, 0, 1, 1], [], []>} : vector<8x16xbf16>, vector<16x32xbf16>, vector<8x32xf32> -> vector<8x32xf32>
    %78 = vector.broadcast %75 : vector<1x32xf32> to vector<8x32xf32>
    %79 = arith.addf %77, %78 : vector<8x32xf32>
    %cst_56 = arith.constant 0.000000e+00 : f32
    %80 = vector.broadcast %cst_56 : f32 to vector<8x32xf32>
    %81 = arith.maximumf %79, %80 : vector<8x32xf32>
    %c2_57 = arith.constant 2 : index
    %c0_58 = arith.constant 0 : index
    %c0_59 = arith.constant 0 : index
    %82 = vector.load %arg6[%c2_57, %c0_58, %c0_59] : memref<4x32x64xbf16, #tpu.memory_space<vmem>>, vector<1x32x64xbf16>
    %83 = vector.shape_cast %82 : vector<1x32x64xbf16> to vector<32x64xbf16>
    %c2_60 = arith.constant 2 : index
    %c0_61 = arith.constant 0 : index
    %c0_62 = arith.constant 0 : index
    %84 = vector.load %arg7[%c2_60, %c0_61, %c0_62] : memref<4x1x64xf32, #tpu.memory_space<vmem>>, vector<1x1x64xf32>
    %85 = vector.shape_cast %84 : vector<1x1x64xf32> to vector<1x64xf32>
    %86 = arith.truncf %81 : vector<8x32xf32> to vector<8x32xbf16>
    %cst_63 = arith.constant dense<0.000000e+00> : vector<8x64xf32>
    %87 = tpu.matmul %86, %83, %cst_63 {dimension_numbers = #tpu.dot_dimension_numbers<[1], [0], [0], [1], [0, 0, 1, 1], [], []>} : vector<8x32xbf16>, vector<32x64xbf16>, vector<8x64xf32> -> vector<8x64xf32>
    %88 = vector.broadcast %85 : vector<1x64xf32> to vector<8x64xf32>
    %89 = arith.addf %87, %88 : vector<8x64xf32>
    %cst_64 = arith.constant 0.000000e+00 : f32
    %90 = vector.broadcast %cst_64 : f32 to vector<8x64xf32>
    %91 = arith.maximumf %89, %90 : vector<8x64xf32>
    %c2_65 = arith.constant 2 : index
    %c0_66 = arith.constant 0 : index
    %c0_67 = arith.constant 0 : index
    %92 = vector.load %arg8[%c2_65, %c0_66, %c0_67] : memref<4x64x24xbf16, #tpu.memory_space<vmem>>, vector<1x64x24xbf16>
    %93 = vector.shape_cast %92 : vector<1x64x24xbf16> to vector<64x24xbf16>
    %c2_68 = arith.constant 2 : index
    %c0_69 = arith.constant 0 : index
    %c0_70 = arith.constant 0 : index
    %94 = vector.load %arg9[%c2_68, %c0_69, %c0_70] : memref<4x1x24xf32, #tpu.memory_space<vmem>>, vector<1x1x24xf32>
    %95 = vector.shape_cast %94 : vector<1x1x24xf32> to vector<1x24xf32>
    %96 = arith.truncf %91 : vector<8x64xf32> to vector<8x64xbf16>
    %cst_71 = arith.constant dense<0.000000e+00> : vector<8x24xf32>
    %97 = tpu.matmul %96, %93, %cst_71 {dimension_numbers = #tpu.dot_dimension_numbers<[1], [0], [0], [1], [0, 0, 1, 1], [], []>} : vector<8x64xbf16>, vector<64x24xbf16>, vector<8x24xf32> -> vector<8x24xf32>
    %98 = vector.broadcast %95 : vector<1x24xf32> to vector<8x24xf32>
    %99 = arith.addf %97, %98 : vector<8x24xf32>
    %100 = vector.extract_strided_slice %99 {offsets = [0, 0], sizes = [8, 8], strides = [1, 1]} : vector<8x24xf32> to vector<8x8xf32>
    %101 = arith.mulf %100, %1 : vector<8x8xf32>
    %102 = arith.addf %68, %101 : vector<8x8xf32>
    %103 = vector.extract_strided_slice %99 {offsets = [0, 8], sizes = [8, 16], strides = [1, 1]} : vector<8x24xf32> to vector<8x16xf32>
    %104 = arith.mulf %103, %0 : vector<8x16xf32>
    %105 = arith.subf %71, %104 : vector<8x16xf32>
    %c3 = arith.constant 3 : index
    %c0_72 = arith.constant 0 : index
    %c0_73 = arith.constant 0 : index
    %106 = vector.load %arg4[%c3, %c0_72, %c0_73] : memref<4x16x32xbf16, #tpu.memory_space<vmem>>, vector<1x16x32xbf16>
    %107 = vector.shape_cast %106 : vector<1x16x32xbf16> to vector<16x32xbf16>
    %c3_74 = arith.constant 3 : index
    %c0_75 = arith.constant 0 : index
    %c0_76 = arith.constant 0 : index
    %108 = vector.load %arg5[%c3_74, %c0_75, %c0_76] : memref<4x1x32xf32, #tpu.memory_space<vmem>>, vector<1x1x32xf32>
    %109 = vector.shape_cast %108 : vector<1x1x32xf32> to vector<1x32xf32>
    %110 = arith.truncf %105 : vector<8x16xf32> to vector<8x16xbf16>
    %cst_77 = arith.constant dense<0.000000e+00> : vector<8x32xf32>
    %111 = tpu.matmul %110, %107, %cst_77 {dimension_numbers = #tpu.dot_dimension_numbers<[1], [0], [0], [1], [0, 0, 1, 1], [], []>} : vector<8x16xbf16>, vector<16x32xbf16>, vector<8x32xf32> -> vector<8x32xf32>
    %112 = vector.broadcast %109 : vector<1x32xf32> to vector<8x32xf32>
    %113 = arith.addf %111, %112 : vector<8x32xf32>
    %cst_78 = arith.constant 0.000000e+00 : f32
    %114 = vector.broadcast %cst_78 : f32 to vector<8x32xf32>
    %115 = arith.maximumf %113, %114 : vector<8x32xf32>
    %c3_79 = arith.constant 3 : index
    %c0_80 = arith.constant 0 : index
    %c0_81 = arith.constant 0 : index
    %116 = vector.load %arg6[%c3_79, %c0_80, %c0_81] : memref<4x32x64xbf16, #tpu.memory_space<vmem>>, vector<1x32x64xbf16>
    %117 = vector.shape_cast %116 : vector<1x32x64xbf16> to vector<32x64xbf16>
    %c3_82 = arith.constant 3 : index
    %c0_83 = arith.constant 0 : index
    %c0_84 = arith.constant 0 : index
    %118 = vector.load %arg7[%c3_82, %c0_83, %c0_84] : memref<4x1x64xf32, #tpu.memory_space<vmem>>, vector<1x1x64xf32>
    %119 = vector.shape_cast %118 : vector<1x1x64xf32> to vector<1x64xf32>
    %120 = arith.truncf %115 : vector<8x32xf32> to vector<8x32xbf16>
    %cst_85 = arith.constant dense<0.000000e+00> : vector<8x64xf32>
    %121 = tpu.matmul %120, %117, %cst_85 {dimension_numbers = #tpu.dot_dimension_numbers<[1], [0], [0], [1], [0, 0, 1, 1], [], []>} : vector<8x32xbf16>, vector<32x64xbf16>, vector<8x64xf32> -> vector<8x64xf32>
    %122 = vector.broadcast %119 : vector<1x64xf32> to vector<8x64xf32>
    %123 = arith.addf %121, %122 : vector<8x64xf32>
    %cst_86 = arith.constant 0.000000e+00 : f32
    %124 = vector.broadcast %cst_86 : f32 to vector<8x64xf32>
    %125 = arith.maximumf %123, %124 : vector<8x64xf32>
    %c3_87 = arith.constant 3 : index
    %c0_88 = arith.constant 0 : index
    %c0_89 = arith.constant 0 : index
    %126 = vector.load %arg8[%c3_87, %c0_88, %c0_89] : memref<4x64x24xbf16, #tpu.memory_space<vmem>>, vector<1x64x24xbf16>
    %127 = vector.shape_cast %126 : vector<1x64x24xbf16> to vector<64x24xbf16>
    %c3_90 = arith.constant 3 : index
    %c0_91 = arith.constant 0 : index
    %c0_92 = arith.constant 0 : index
    %128 = vector.load %arg9[%c3_90, %c0_91, %c0_92] : memref<4x1x24xf32, #tpu.memory_space<vmem>>, vector<1x1x24xf32>
    %129 = vector.shape_cast %128 : vector<1x1x24xf32> to vector<1x24xf32>
    %130 = arith.truncf %125 : vector<8x64xf32> to vector<8x64xbf16>
    %cst_93 = arith.constant dense<0.000000e+00> : vector<8x24xf32>
    %131 = tpu.matmul %130, %127, %cst_93 {dimension_numbers = #tpu.dot_dimension_numbers<[1], [0], [0], [1], [0, 0, 1, 1], [], []>} : vector<8x64xbf16>, vector<64x24xbf16>, vector<8x24xf32> -> vector<8x24xf32>
    %132 = vector.broadcast %129 : vector<1x24xf32> to vector<8x24xf32>
    %133 = arith.addf %131, %132 : vector<8x24xf32>
    %134 = vector.extract_strided_slice %133 {offsets = [0, 0], sizes = [8, 8], strides = [1, 1]} : vector<8x24xf32> to vector<8x8xf32>
    %135 = arith.mulf %134, %1 : vector<8x8xf32>
    %136 = arith.addf %102, %135 : vector<8x8xf32>
    %c0_94 = arith.constant 0 : index
    %c0_95 = arith.constant 0 : index
    %137 = vector.load %arg10[%c0_94, %c0_95] : memref<8x8xf32, #tpu.memory_space<vmem>>, vector<8x8xf32>
    tpu.vector_store %arg10[%c0_94, %c0_95], %136 {strides = array<i32>} : memref<8x8xf32, #tpu.memory_space<vmem>>, vector<8x8xf32>,
    return
  }
  func.func @transform_0(%arg0: i32) -> (i32, i32) {
    %c0_i32 = arith.constant 0 : i32
    %c0_i32_0 = arith.constant 0 : i32
    return %arg0, %c0_i32 : i32, i32
  }
  func.func @transform_1(%arg0: i32) -> (i32, i32) {
    %c0_i32 = arith.constant 0 : i32
    %c0_i32_0 = arith.constant 0 : i32
    return %arg0, %c0_i32 : i32, i32
  }
  func.func @transform_2(%arg0: i32) -> (i32, i32) {
    %c0_i32 = arith.constant 0 : i32
    %c0_i32_0 = arith.constant 0 : i32
    return %arg0, %c0_i32 : i32, i32
  }
  func.func @transform_3(%arg0: i32) -> (i32, i32, i32) {
    %c0_i32 = arith.constant 0 : i32
    %c0_i32_0 = arith.constant 0 : i32
    %c0_i32_1 = arith.constant 0 : i32
    %c0_i32_2 = arith.constant 0 : i32
    return %c0_i32, %c0_i32_0, %c0_i32_1 : i32, i32, i32
  }
  func.func @transform_4(%arg0: i32) -> (i32, i32, i32) {
    %c0_i32 = arith.constant 0 : i32
    %c0_i32_0 = arith.constant 0 : i32
    %c0_i32_1 = arith.constant 0 : i32
    %c0_i32_2 = arith.constant 0 : i32
    return %c0_i32, %c0_i32_0, %c0_i32_1 : i32, i32, i32
  }
  func.func @transform_5(%arg0: i32) -> (i32, i32, i32) {
    %c0_i32 = arith.constant 0 : i32
    %c0_i32_0 = arith.constant 0 : i32
    %c0_i32_1 = arith.constant 0 : i32
    %c0_i32_2 = arith.constant 0 : i32
    return %c0_i32, %c0_i32_0, %c0_i32_1 : i32, i32, i32
  }
  func.func @transform_6(%arg0: i32) -> (i32, i32, i32) {
    %c0_i32 = arith.constant 0 : i32
    %c0_i32_0 = arith.constant 0 : i32
    %c0_i32_1 = arith.constant 0 : i32
    %c0_i32_2 = arith.constant 0 : i32
    return %c0_i32, %c0_i32_0, %c0_i32_1 : i32, i32, i32
  }
  func.func @transform_7(%arg0: i32) -> (i32, i32, i32) {
    %c0_i32 = arith.constant 0 : i32
    %c0_i32_0 = arith.constant 0 : i32
    %c0_i32_1 = arith.constant 0 : i32
    %c0_i32_2 = arith.constant 0 : i32
    return %c0_i32, %c0_i32_0, %c0_i32_1 : i32, i32, i32
  }
  func.func @transform_8(%arg0: i32) -> (i32, i32, i32) {
    %c0_i32 = arith.constant 0 : i32
    %c0_i32_0 = arith.constant 0 : i32
    %c0_i32_1 = arith.constant 0 : i32
    %c0_i32_2 = arith.constant 0 : i32
    return %c0_i32, %c0_i32_0, %c0_i32_1 : i32, i32, i32
  }
  func.func @transform_9(%arg0: i32) -> (i32, i32) {
    %c0_i32 = arith.constant 0 : i32
    %c0_i32_0 = arith.constant 0 : i32
    return %arg0, %c0_i32 : i32, i32
  }
}

</mosaic_0001>

<llo_original>
// kernel: nbeats_pallas.1
$region0: #{nbeats_pallas.1}
  #allocation0 [shape = 'u32[]', space=smem, size = 0x4, offset = 0x4, fixed_abs, tag = 'smem constant byte address 0x4 - core index']
  #allocation1 [shape = 'u32[144,128]{1,0:T(1,128)}', space=vmem, size = 0x12000, scoped, tag = 'internal scratch']
  %s0 = inlined_call_operand.vmem [shape: f32[8,16], index: 0, kind: input, shape index: {}]
  %s1 = inlined_call_operand.vmem [shape: f32[8,16], index: 1, kind: input, shape index: {}]
  %s2 = inlined_call_operand.vmem [shape: f32[8,8], index: 2, kind: input, shape index: {}]
  %s3 = inlined_call_operand.vmem [shape: bf16[4,16,32], index: 3, kind: input, shape index: {}]
  %s4 = inlined_call_operand.vmem [shape: f32[4,1,32], index: 4, kind: input, shape index: {}]
  %s5 = inlined_call_operand.vmem [shape: bf16[4,32,64], index: 5, kind: input, shape index: {}]
  %s6 = inlined_call_operand.vmem [shape: f32[4,1,64], index: 6, kind: input, shape index: {}]
  %s7 = inlined_call_operand.vmem [shape: bf16[4,64,24], index: 7, kind: input, shape index: {}]
  %s8 = inlined_call_operand.vmem [shape: f32[4,1,24], index: 8, kind: input, shape index: {}]
  %s9 = inlined_call_operand.vmem [shape: f32[8,8], index: 9, kind: output, shape index: {}]
  %s10 = sld [smem:[#allocation0]]
  $region46: #{nbeats_pallas.1} parent=0
    _
  %s12 = ssub.s32 1, %s10
  %s13 = scalar_select 0, %s12, %s10
  // Predicated region
  $region2: #{nbeats_pallas.1} parent=0 // pred_check
    _
  $region3: #{nbeats_pallas.1} parent=0 // pred_check_branch
    %15 = sbr.rel (0) target = $region5
  $region4: #{nbeats_pallas.1} parent=0 // pred_region
    _
  $region5: #{nbeats_pallas.1} parent=0 // pred_fallthru
    _
  // Predicated region
  $region6: #{nbeats_pallas.1} parent=0 // pred_check
    _
  $region7: #{nbeats_pallas.1} parent=0 // pred_check_branch
    %17 = sbr.rel (0) target = $region9
  $region8: #{nbeats_pallas.1} parent=0 // pred_region
    _
  $region9: #{nbeats_pallas.1} parent=0 // pred_fallthru
    _
  // Predicated region
  $region10: #{nbeats_pallas.1} parent=0 // pred_check
    _
  $region11: #{nbeats_pallas.1} parent=0 // pred_check_branch
    %19 = sbr.rel (0) target = $region13
  $region12: #{nbeats_pallas.1} parent=0 // pred_region
    _
  $region13: #{nbeats_pallas.1} parent=0 // pred_fallthru
    _
  // Predicated region
  $region14: #{nbeats_pallas.1} parent=0 // pred_check
    _
  $region15: #{nbeats_pallas.1} parent=0 // pred_check_branch
    %21 = sbr.rel (0) target = $region17
  $region16: #{nbeats_pallas.1} parent=0 // pred_region
    _
  $region17: #{nbeats_pallas.1} parent=0 // pred_fallthru
    _
  // Predicated region
  $region18: #{nbeats_pallas.1} parent=0 // pred_check
    _
  $region19: #{nbeats_pallas.1} parent=0 // pred_check_branch
    %23 = sbr.rel (0) target = $region21
  $region20: #{nbeats_pallas.1} parent=0 // pred_region
    _
  $region21: #{nbeats_pallas.1} parent=0 // pred_fallthru
    _
  // Predicated region
  $region22: #{nbeats_pallas.1} parent=0 // pred_check
    _
  $region23: #{nbeats_pallas.1} parent=0 // pred_check_branch
    %25 = sbr.rel (0) target = $region25
  $region24: #{nbeats_pallas.1} parent=0 // pred_region
    _
  $region25: #{nbeats_pallas.1} parent=0 // pred_fallthru
    _
  // Predicated region
  $region26: #{nbeats_pallas.1} parent=0 // pred_check
    _
  $region27: #{nbeats_pallas.1} parent=0 // pred_check_branch
    %27 = sbr.rel (0) target = $region29
  $region28: #{nbeats_pallas.1} parent=0 // pred_region
    _
  $region29: #{nbeats_pallas.1} parent=0 // pred_fallthru
    _
  // Predicated region
  $region30: #{nbeats_pallas.1} parent=0 // pred_check
    _
  $region31: #{nbeats_pallas.1} parent=0 // pred_check_branch
    %29 = sbr.rel (0) target = $region33
  $region32: #{nbeats_pallas.1} parent=0 // pred_region
    _
  $region33: #{nbeats_pallas.1} parent=0 // pred_fallthru
    _
  // Predicated region
  $region34: #{nbeats_pallas.1} parent=0 // pred_check
    _
  $region35: #{nbeats_pallas.1} parent=0 // pred_check_branch
    %31 = sbr.rel (0) target = $region37
  $region36: #{nbeats_pallas.1} parent=0 // pred_region
    _
  $region37: #{nbeats_pallas.1} parent=0 // pred_fallthru
    _
  %v33 = vld [vmem:[%s1] sm:$0xff]
  %v34 = vld [vmem:[%s2] sm:$0xff]
  %v35 = vld [vmem:[%s0] sm:$0xff]
  %v36 = vld [vmem:[%s3] sm:$0xf]
  %v37 = vld [vmem:[%s3 + $0x4] sm:$0xf]
  %v38 = vld [vmem:[%s4] sm:$0x1]
  %v39 = vpack.c.bf16 %v35, %v35
  %v41 = vlaneseq
  %v42 = vshrl.u32 %v41, 7
  %v43 = vsub.s32 0, %v42
  %v44 = vrot.slane %v38, %v43
  %v48 = vunpack.c.l.b16 %v36
  %v49 = vunpack.c.l.b16 %v37
  %v50 = vpack.c.b16 %v49, %v48
  %vm52 = vcmask 130048
  %v54 = vsel %vm52, %v39, 0
  %56 = vmatprep.subr.bf16.mxu0 0
  %57 = vmatpush1.bf16.msra.mxu0 %v50
  %58 = vmatprep.subr.bf16.mxu0 0
  %59 = vmatpush1.bf16.msra.mxu0 0
  %60 = vmatprep.subr.bf16.mxu0 0
  %61 = vmatpush1.bf16.msra.mxu0 0
  %62 = vmatprep.subr.bf16.mxu0 0
  %63 = vmatpush1.bf16.msra.mxu0 0
  %64 = vmatprep.subr.bf16.mxu0 0
  %65 = vmatpush1.bf16.msra.mxu0 0
  %66 = vmatprep.subr.bf16.mxu0 0
  %67 = vmatpush1.bf16.msra.mxu0 0
  %68 = vmatprep.subr.bf16.mxu0 0
  %69 = vmatpush1.bf16.msra.mxu0 0
  %70 = vmatprep.subr.bf16.mxu0 0
  %71 = vmatpush1.bf16.msra.mxu0 0
  %72 = vmatprep.subr.bf16.mxu0 0
  %73 = vmatpush1.bf16.msra.mxu0 0
  %74 = vmatprep.subr.bf16.mxu0 0
  %75 = vmatpush1.bf16.msra.mxu0 0
  %76 = vmatprep.subr.bf16.mxu0 0
  %77 = vmatpush1.bf16.msra.mxu0 0
  %78 = vmatprep.subr.bf16.mxu0 0
  %79 = vmatpush1.bf16.msra.mxu0 0
  %80 = vmatprep.subr.bf16.mxu0 0
  %81 = vmatpush1.bf16.msra.mxu0 0
  %82 = vmatprep.subr.bf16.mxu0 0
  %83 = vmatpush1.bf16.msra.mxu0 0
  %84 = vmatprep.subr.bf16.mxu0 0
  %85 = vmatpush1.bf16.msra.mxu0 0
  %86 = vmatprep.subr.bf16.mxu0 0
  %87 = vmatpush1.bf16.msra.mxu0 0
  %88 = vmatprep.mubr.bf16.mxu0 0
  %89 = vmatmul.mubr.bf16.gmra.mrb[0].mxu0 %v54
  %v90 = vpop.f32.mrb[0].mxu0
  %v91 = vadd.f32 %v44, %v90
  %v92 = vpop.f32.mrb[0].mxu0
  %v93 = vpop.f32.mrb[0].mxu0
  %v94 = vpop.f32.mrb[0].mxu0
  %95 = vdwg.mxu0
  %v96 = vmax.f32 %v91, 0.0
  %v97 = vld [vmem:[%s5] sm:$0xf]
  %v98 = vld [vmem:[%s5 + $0x4] sm:$0xf]
  %v99 = vld [vmem:[%s5 + $0x8] sm:$0xf]
  %v100 = vld [vmem:[%s5 + $0xc] sm:$0xf]
  %v101 = vld [vmem:[%s6] sm:$0x1]
  %v102 = vpack.c.bf16 %v96, %v96
  %v104 = vlaneseq
  %v105 = vshrl.u32 %v104, 7
  %v106 = vsub.s32 0, %v105
  %v107 = vrot.slane %v101, %v106
  %v113 = vunpack.c.l.b16 %v97
  %v114 = vunpack.c.l.b16 %v98
  %v115 = vunpack.c.l.b16 %v99
  %v116 = vunpack.c.l.b16 %v100
  %v117 = vpack.c.b16 %v114, %v113
  %v118 = vpack.c.b16 %v116, %v115
  %vm121 = vcmask 261120
  %v123 = vsel %vm121, %v102, 0
  %125 = vmatprep.subr.bf16.mxu0 0
  %126 = vmatpush1.bf16.msra.mxu0 %v117
  %127 = vmatprep.subr.bf16.mxu0 0
  %128 = vmatpush1.bf16.msra.mxu0 %v118
  %129 = vmatprep.subr.bf16.mxu0 0
  %130 = vmatpush1.bf16.msra.mxu0 0
  %131 = vmatprep.subr.bf16.mxu0 0
  %132 = vmatpush1.bf16.msra.mxu0 0
  %133 = vmatprep.subr.bf16.mxu0 0
  %134 = vmatpush1.bf16.msra.mxu0 0
  %135 = vmatprep.subr.bf16.mxu0 0
  %136 = vmatpush1.bf16.msra.mxu0 0
  %137 = vmatprep.subr.bf16.mxu0 0
  %138 = vmatpush1.bf16.msra.mxu0 0
  %139 = vmatprep.subr.bf16.mxu0 0
  %140 = vmatpush1.bf16.msra.mxu0 0
  %141 = vmatprep.subr.bf16.mxu0 0
  %142 = vmatpush1.bf16.msra.mxu0 0
  %143 = vmatprep.subr.bf16.mxu0 0
  %144 = vmatpush1.bf16.msra.mxu0 0
  %145 = vmatprep.subr.bf16.mxu0 0
  %146 = vmatpush1.bf16.msra.mxu0 0
  %147 = vmatprep.subr.bf16.mxu0 0
  %148 = vmatpush1.bf16.msra.mxu0 0
  %149 = vmatprep.subr.bf16.mxu0 0
  %150 = vmatpush1.bf16.msra.mxu0 0
  %151 = vmatprep.subr.bf16.mxu0 0
  %152 = vmatpush1.bf16.msra.mxu0 0
  %153 = vmatprep.subr.bf16.mxu0 0
  %154 = vmatpush1.bf16.msra.mxu0 0
  %155 = vmatprep.subr.bf16.mxu0 0
  %156 = vmatpush1.bf16.msra.mxu0 0
  %157 = vmatprep.mubr.bf16.mxu0 0
  %158 = vmatmul.mubr.bf16.gmra.mrb[0].mxu0 %v123
  %v159 = vpop.f32.mrb[0].mxu0
  %v160 = vadd.f32 %v107, %v159
  %v161 = vpop.f32.mrb[0].mxu0
  %v162 = vpop.f32.mrb[0].mxu0
  %v163 = vpop.f32.mrb[0].mxu0
  %164 = vdwg.mxu0
  %v165 = vmax.f32 %v160, 0.0
  %v166 = vld [vmem:[%s7] sm:$0xf]
  %v167 = vld [vmem:[%s7 + $0x4] sm:$0xf]
  %v168 = vld [vmem:[%s7 + $0x8] sm:$0xf]
  %v169 = vld [vmem:[%s7 + $0xc] sm:$0xf]
  %v170 = vld [vmem:[%s7 + $0x10] sm:$0xf]
  %v171 = vld [vmem:[%s7 + $0x14] sm:$0xf]
  %v172 = vld [vmem:[%s7 + $0x18] sm:$0xf]
  %v173 = vld [vmem:[%s7 + $0x1c] sm:$0xf]
  %v174 = vld [vmem:[%s8] sm:$0x1]
  %v175 = vpack.c.bf16 %v165, %v165
  %v177 = vlaneseq
  %v178 = vshrl.u32 %v177, 7
  %v179 = vsub.s32 0, %v178
  %v180 = vrot.slane %v174, %v179
  %v190 = vunpack.c.l.b16 %v166
  %v191 = vunpack.c.l.b16 %v167
  %v192 = vunpack.c.l.b16 %v168
  %v193 = vunpack.c.l.b16 %v169
  %v194 = vunpack.c.l.b16 %v170
  %v195 = vunpack.c.l.b16 %v171
  %v196 = vunpack.c.l.b16 %v172
  %v197 = vunpack.c.l.b16 %v173
  %v198 = vpack.c.b16 %v191, %v190
  %v199 = vpack.c.b16 %v193, %v192
  %v200 = vpack.c.b16 %v195, %v194
  %v201 = vpack.c.b16 %v197, %v196
  %vm206 = vcmask 523264
  %v208 = vsel %vm206, %v175, 0
  %210 = vmatprep.subr.bf16.mxu0 0
  %211 = vmatpush1.bf16.msra.mxu0 %v198
  %212 = vmatprep.subr.bf16.mxu0 0
  %213 = vmatpush1.bf16.msra.mxu0 %v199
  %214 = vmatprep.subr.bf16.mxu0 0
  %215 = vmatpush1.bf16.msra.mxu0 %v200
  %216 = vmatprep.subr.bf16.mxu0 0
  %217 = vmatpush1.bf16.msra.mxu0 %v201
  %218 = vmatprep.subr.bf16.mxu0 0
  %219 = vmatpush1.bf16.msra.mxu0 0
  %220 = vmatprep.subr.bf16.mxu0 0
  %221 = vmatpush1.bf16.msra.mxu0 0
  %222 = vmatprep.subr.bf16.mxu0 0
  %223 = vmatpush1.bf16.msra.mxu0 0
  %224 = vmatprep.subr.bf16.mxu0 0
  %225 = vmatpush1.bf16.msra.mxu0 0
  %226 = vmatprep.subr.bf16.mxu0 0
  %227 = vmatpush1.bf16.msra.mxu0 0
  %228 = vmatprep.subr.bf16.mxu0 0
  %229 = vmatpush1.bf16.msra.mxu0 0
  %230 = vmatprep.subr.bf16.mxu0 0
  %231 = vmatpush1.bf16.msra.mxu0 0
  %232 = vmatprep.subr.bf16.mxu0 0
  %233 = vmatpush1.bf16.msra.mxu0 0
  %234 = vmatprep.subr.bf16.mxu0 0
  %235 = vmatpush1.bf16.msra.mxu0 0
  %236 = vmatprep.subr.bf16.mxu0 0
  %237 = vmatpush1.bf16.msra.mxu0 0
  %238 = vmatprep.subr.bf16.mxu0 0
  %239 = vmatpush1.bf16.msra.mxu0 0
  %240 = vmatprep.subr.bf16.mxu0 0
  %241 = vmatpush1.bf16.msra.mxu0 0
  %242 = vmatprep.mubr.bf16.mxu0 0
  %243 = vmatmul.mubr.bf16.gmra.mrb[0].mxu0 %v208
  %v244 = vpop.f32.mrb[0].mxu0
  %v245 = vadd.f32 %v180, %v244
  %v246 = vpop.f32.mrb[0].mxu0
  %v247 = vpop.f32.mrb[0].mxu0
  %v248 = vpop.f32.mrb[0].mxu0
  %249 = vdwg.mxu0
  %v250 = vmul.f32 %v245, %v34
  %v251 = vadd.f32 %v250, 0.0
  %253 = vrot.lane.b32.xlu0 %v33, 8
  %v254 = vpop.permute.xlu0 %253
  %v256 = vmul.f32 %v245, %v254
  %258 = vrot.lane.b32.xlu0 %v256, 120
  %v259 = vpop.permute.xlu0 %258
  %v261 = vsub.f32 %v35, %v259
  %s262 = scalar_lea.vmem %s3, 8
  %v263 = vld [vmem:[%s262] sm:$0xf]
  %v264 = vld [vmem:[%s262 + $0x4] sm:$0xf]
  %s265 = scalar_lea.vmem %s4, 1
  %v266 = vld [vmem:[%s265] sm:$0x1]
  %v267 = vpack.c.bf16 %v261, %v261
  %v269 = vlaneseq
  %v270 = vshrl.u32 %v269, 7
  %v271 = vsub.s32 0, %v270
  %v272 = vrot.slane %v266, %v271
  %v276 = vunpack.c.l.b16 %v263
  %v277 = vunpack.c.l.b16 %v264
  %v278 = vpack.c.b16 %v277, %v276
  %v281 = vsel %vm52, %v267, 0
  %283 = vmatprep.subr.bf16.mxu0 0
  %284 = vmatpush1.bf16.msra.mxu0 %v278
  %285 = vmatprep.subr.bf16.mxu0 0
  %286 = vmatpush1.bf16.msra.mxu0 0
  %287 = vmatprep.subr.bf16.mxu0 0
  %288 = vmatpush1.bf16.msra.mxu0 0
  %289 = vmatprep.subr.bf16.mxu0 0
  %290 = vmatpush1.bf16.msra.mxu0 0
  %291 = vmatprep.subr.bf16.mxu0 0
  %292 = vmatpush1.bf16.msra.mxu0 0
  %293 = vmatprep.subr.bf16.mxu0 0
  %294 = vmatpush1.bf16.msra.mxu0 0
  %295 = vmatprep.subr.bf16.mxu0 0
  %296 = vmatpush1.bf16.msra.mxu0 0
  %297 = vmatprep.subr.bf16.mxu0 0
  %298 = vmatpush1.bf16.msra.mxu0 0
  %299 = vmatprep.subr.bf16.mxu0 0
  %300 = vmatpush1.bf16.msra.mxu0 0
  %301 = vmatprep.subr.bf16.mxu0 0
  %302 = vmatpush1.bf16.msra.mxu0 0
  %303 = vmatprep.subr.bf16.mxu0 0
  %304 = vmatpush1.bf16.msra.mxu0 0
  %305 = vmatprep.subr.bf16.mxu0 0
  %306 = vmatpush1.bf16.msra.mxu0 0
  %307 = vmatprep.subr.bf16.mxu0 0
  %308 = vmatpush1.bf16.msra.mxu0 0
  %309 = vmatprep.subr.bf16.mxu0 0
  %310 = vmatpush1.bf16.msra.mxu0 0
  %311 = vmatprep.subr.bf16.mxu0 0
  %312 = vmatpush1.bf16.msra.mxu0 0
  %313 = vmatprep.subr.bf16.mxu0 0
  %314 = vmatpush1.bf16.msra.mxu0 0
  %315 = vmatprep.mubr.bf16.mxu0 0
  %316 = vmatmul.mubr.bf16.gmra.mrb[0].mxu0 %v281
  %v317 = vpop.f32.mrb[0].mxu0
  %v318 = vadd.f32 %v272, %v317
  %v319 = vpop.f32.mrb[0].mxu0
  %v320 = vpop.f32.mrb[0].mxu0
  %v321 = vpop.f32.mrb[0].mxu0
  %322 = vdwg.mxu0
  %v323 = vmax.f32 %v318, 0.0
  %s324 = scalar_lea.vmem %s5, 16
  %v325 = vld [vmem:[%s324] sm:$0xf]
  %v326 = vld [vmem:[%s324 + $0x4] sm:$0xf]
  %v327 = vld [vmem:[%s324 + $0x8] sm:$0xf]
  %v328 = vld [vmem:[%s324 + $0xc] sm:$0xf]
  %s329 = scalar_lea.vmem %s6, 1
  %v330 = vld [vmem:[%s329] sm:$0x1]
  %v331 = vpack.c.bf16 %v323, %v323
  %v333 = vlaneseq
  %v334 = vshrl.u32 %v333, 7
  %v335 = vsub.s32 0, %v334
  %v336 = vrot.slane %v330, %v335
  %v342 = vunpack.c.l.b16 %v325
  %v343 = vunpack.c.l.b16 %v326
  %v344 = vunpack.c.l.b16 %v327
  %v345 = vunpack.c.l.b16 %v328
  %v346 = vpack.c.b16 %v343, %v342
  %v347 = vpack.c.b16 %v345, %v344
  %v351 = vsel %vm121, %v331, 0
  %353 = vmatprep.subr.bf16.mxu0 0
  %354 = vmatpush1.bf16.msra.mxu0 %v346
  %355 = vmatprep.subr.bf16.mxu0 0
  %356 = vmatpush1.bf16.msra.mxu0 %v347
  %357 = vmatprep.subr.bf16.mxu0 0
  %358 = vmatpush1.bf16.msra.mxu0 0
  %359 = vmatprep.subr.bf16.mxu0 0
  %360 = vmatpush1.bf16.msra.mxu0 0
  %361 = vmatprep.subr.bf16.mxu0 0
  %362 = vmatpush1.bf16.msra.mxu0 0
  %363 = vmatprep.subr.bf16.mxu0 0
  %364 = vmatpush1.bf16.msra.mxu0 0
  %365 = vmatprep.subr.bf16.mxu0 0
  %366 = vmatpush1.bf16.msra.mxu0 0
  %367 = vmatprep.subr.bf16.mxu0 0
  %368 = vmatpush1.bf16.msra.mxu0 0
  %369 = vmatprep.subr.bf16.mxu0 0
  %370 = vmatpush1.bf16.msra.mxu0 0
  %371 = vmatprep.subr.bf16.mxu0 0
  %372 = vmatpush1.bf16.msra.mxu0 0
  %373 = vmatprep.subr.bf16.mxu0 0
  %374 = vmatpush1.bf16.msra.mxu0 0
  %375 = vmatprep.subr.bf16.mxu0 0
  %376 = vmatpush1.bf16.msra.mxu0 0
  %377 = vmatprep.subr.bf16.mxu0 0
  %378 = vmatpush1.bf16.msra.mxu0 0
  %379 = vmatprep.subr.bf16.mxu0 0
  %380 = vmatpush1.bf16.msra.mxu0 0
  %381 = vmatprep.subr.bf16.mxu0 0
  %382 = vmatpush1.bf16.msra.mxu0 0
  %383 = vmatprep.subr.bf16.mxu0 0
  %384 = vmatpush1.bf16.msra.mxu0 0
  %385 = vmatprep.mubr.bf16.mxu0 0
  %386 = vmatmul.mubr.bf16.gmra.mrb[0].mxu0 %v351
  %v387 = vpop.f32.mrb[0].mxu0
  %v388 = vadd.f32 %v336, %v387
  %v389 = vpop.f32.mrb[0].mxu0
  %v390 = vpop.f32.mrb[0].mxu0
  %v391 = vpop.f32.mrb[0].mxu0
  %392 = vdwg.mxu0
  %v393 = vmax.f32 %v388, 0.0
  %s394 = scalar_lea.vmem %s7, 32
  %v395 = vld [vmem:[%s394] sm:$0xf]
  %v396 = vld [vmem:[%s394 + $0x4] sm:$0xf]
  %v397 = vld [vmem:[%s394 + $0x8] sm:$0xf]
  %v398 = vld [vmem:[%s394 + $0xc] sm:$0xf]
  %v399 = vld [vmem:[%s394 + $0x10] sm:$0xf]
  %v400 = vld [vmem:[%s394 + $0x14] sm:$0xf]
  %v401 = vld [vmem:[%s394 + $0x18] sm:$0xf]
  %v402 = vld [vmem:[%s394 + $0x1c] sm:$0xf]
  %s403 = scalar_lea.vmem %s8, 1
  %v404 = vld [vmem:[%s403] sm:$0x1]
  %v405 = vpack.c.bf16 %v393, %v393
  %v407 = vlaneseq
  %v408 = vshrl.u32 %v407, 7
  %v409 = vsub.s32 0, %v408
  %v410 = vrot.slane %v404, %v409
  %v420 = vunpack.c.l.b16 %v395
  %v421 = vunpack.c.l.b16 %v396
  %v422 = vunpack.c.l.b16 %v397
  %v423 = vunpack.c.l.b16 %v398
  %v424 = vunpack.c.l.b16 %v399
  %v425 = vunpack.c.l.b16 %v400
  %v426 = vunpack.c.l.b16 %v401
  %v427 = vunpack.c.l.b16 %v402
  %v428 = vpack.c.b16 %v421, %v420
  %v429 = vpack.c.b16 %v423, %v422
  %v430 = vpack.c.b16 %v425, %v424
  %v431 = vpack.c.b16 %v427, %v426
  %v437 = vsel %vm206, %v405, 0
  %439 = vmatprep.subr.bf16.mxu0 0
  %440 = vmatpush1.bf16.msra.mxu0 %v428
  %441 = vmatprep.subr.bf16.mxu0 0
  %442 = vmatpush1.bf16.msra.mxu0 %v429
  %443 = vmatprep.subr.bf16.mxu0 0
  %444 = vmatpush1.bf16.msra.mxu0 %v430
  %445 = vmatprep.subr.bf16.mxu0 0
  %446 = vmatpush1.bf16.msra.mxu0 %v431
  %447 = vmatprep.subr.bf16.mxu0 0
  %448 = vmatpush1.bf16.msra.mxu0 0
  %449 = vmatprep.subr.bf16.mxu0 0
  %450 = vmatpush1.bf16.msra.mxu0 0
  %451 = vmatprep.subr.bf16.mxu0 0
  %452 = vmatpush1.bf16.msra.mxu0 0
  %453 = vmatprep.subr.bf16.mxu0 0
  %454 = vmatpush1.bf16.msra.mxu0 0
  %455 = vmatprep.subr.bf16.mxu0 0
  %456 = vmatpush1.bf16.msra.mxu0 0
  %457 = vmatprep.subr.bf16.mxu0 0
  %458 = vmatpush1.bf16.msra.mxu0 0
  %459 = vmatprep.subr.bf16.mxu0 0
  %460 = vmatpush1.bf16.msra.mxu0 0
  %461 = vmatprep.subr.bf16.mxu0 0
  %462 = vmatpush1.bf16.msra.mxu0 0
  %463 = vmatprep.subr.bf16.mxu0 0
  %464 = vmatpush1.bf16.msra.mxu0 0
  %465 = vmatprep.subr.bf16.mxu0 0
  %466 = vmatpush1.bf16.msra.mxu0 0
  %467 = vmatprep.subr.bf16.mxu0 0
  %468 = vmatpush1.bf16.msra.mxu0 0
  %469 = vmatprep.subr.bf16.mxu0 0
  %470 = vmatpush1.bf16.msra.mxu0 0
  %471 = vmatprep.mubr.bf16.mxu0 0
  %472 = vmatmul.mubr.bf16.gmra.mrb[0].mxu0 %v437
  %v473 = vpop.f32.mrb[0].mxu0
  %v474 = vadd.f32 %v410, %v473
  %v475 = vpop.f32.mrb[0].mxu0
  %v476 = vpop.f32.mrb[0].mxu0
  %v477 = vpop.f32.mrb[0].mxu0
  %478 = vdwg.mxu0
  %v479 = vmul.f32 %v474, %v34
  %v480 = vadd.f32 %v251, %v479
  %v481 = vmul.f32 %v474, %v254
  %483 = vrot.lane.b32.xlu0 %v481, 120
  %v484 = vpop.permute.xlu0 %483
  %v486 = vsub.f32 %v261, %v484
  %s487 = scalar_lea.vmem %s3, 16
  %v488 = vld [vmem:[%s487] sm:$0xf]
  %v489 = vld [vmem:[%s487 + $0x4] sm:$0xf]
  %s490 = scalar_lea.vmem %s4, 2
  %v491 = vld [vmem:[%s490] sm:$0x1]
  %v492 = vpack.c.bf16 %v486, %v486
  %v494 = vlaneseq
  %v495 = vshrl.u32 %v494, 7
  %v496 = vsub.s32 0, %v495
  %v497 = vrot.slane %v491, %v496
  %v501 = vunpack.c.l.b16 %v488
  %v502 = vunpack.c.l.b16 %v489
  %v503 = vpack.c.b16 %v502, %v501
  %v506 = vsel %vm52, %v492, 0
  %508 = vmatprep.subr.bf16.mxu0 0
  %509 = vmatpush1.bf16.msra.mxu0 %v503
  %510 = vmatprep.subr.bf16.mxu0 0
  %511 = vmatpush1.bf16.msra.mxu0 0
  %512 = vmatprep.subr.bf16.mxu0 0
  %513 = vmatpush1.bf16.msra.mxu0 0
  %514 = vmatprep.subr.bf16.mxu0 0
  %515 = vmatpush1.bf16.msra.mxu0 0
  %516 = vmatprep.subr.bf16.mxu0 0
  %517 = vmatpush1.bf16.msra.mxu0 0
  %518 = vmatprep.subr.bf16.mxu0 0
  %519 = vmatpush1.bf16.msra.mxu0 0
  %520 = vmatprep.subr.bf16.mxu0 0
  %521 = vmatpush1.bf16.msra.mxu0 0
  %522 = vmatprep.subr.bf16.mxu0 0
  %523 = vmatpush1.bf16.msra.mxu0 0
  %524 = vmatprep.subr.bf16.mxu0 0
  %525 = vmatpush1.bf16.msra.mxu0 0
  %526 = vmatprep.subr.bf16.mxu0 0
  %527 = vmatpush1.bf16.msra.mxu0 0
  %528 = vmatprep.subr.bf16.mxu0 0
  %529 = vmatpush1.bf16.msra.mxu0 0
  %530 = vmatprep.subr.bf16.mxu0 0
  %531 = vmatpush1.bf16.msra.mxu0 0
  %532 = vmatprep.subr.bf16.mxu0 0
  %533 = vmatpush1.bf16.msra.mxu0 0
  %534 = vmatprep.subr.bf16.mxu0 0
  %535 = vmatpush1.bf16.msra.mxu0 0
  %536 = vmatprep.subr.bf16.mxu0 0
  %537 = vmatpush1.bf16.msra.mxu0 0
  %538 = vmatprep.subr.bf16.mxu0 0
  %539 = vmatpush1.bf16.msra.mxu0 0
  %540 = vmatprep.mubr.bf16.mxu0 0
  %541 = vmatmul.mubr.bf16.gmra.mrb[0].mxu0 %v506
  %v542 = vpop.f32.mrb[0].mxu0
  %v543 = vadd.f32 %v497, %v542
  %v544 = vpop.f32.mrb[0].mxu0
  %v545 = vpop.f32.mrb[0].mxu0
  %v546 = vpop.f32.mrb[0].mxu0
  %547 = vdwg.mxu0
  %v548 = vmax.f32 %v543, 0.0
  %s549 = scalar_lea.vmem %s5, 32
  %v550 = vld [vmem:[%s549] sm:$0xf]
  %v551 = vld [vmem:[%s549 + $0x4] sm:$0xf]
  %v552 = vld [vmem:[%s549 + $0x8] sm:$0xf]
  %v553 = vld [vmem:[%s549 + $0xc] sm:$0xf]
  %s554 = scalar_lea.vmem %s6, 2
  %v555 = vld [vmem:[%s554] sm:$0x1]
  %v556 = vpack.c.bf16 %v548, %v548
  %v558 = vlaneseq
  %v559 = vshrl.u32 %v558, 7
  %v560 = vsub.s32 0, %v559
  %v561 = vrot.slane %v555, %v560
  %v567 = vunpack.c.l.b16 %v550
  %v568 = vunpack.c.l.b16 %v551
  %v569 = vunpack.c.l.b16 %v552
  %v570 = vunpack.c.l.b16 %v553
  %v571 = vpack.c.b16 %v568, %v567
  %v572 = vpack.c.b16 %v570, %v569
  %v576 = vsel %vm121, %v556, 0
  %578 = vmatprep.subr.bf16.mxu0 0
  %579 = vmatpush1.bf16.msra.mxu0 %v571
  %580 = vmatprep.subr.bf16.mxu0 0
  %581 = vmatpush1.bf16.msra.mxu0 %v572
  %582 = vmatprep.subr.bf16.mxu0 0
  %583 = vmatpush1.bf16.msra.mxu0 0
  %584 = vmatprep.subr.bf16.mxu0 0
  %585 = vmatpush1.bf16.msra.mxu0 0
  %586 = vmatprep.subr.bf16.mxu0 0
  %587 = vmatpush1.bf16.msra.mxu0 0
  %588 = vmatprep.subr.bf16.mxu0 0
  %589 = vmatpush1.bf16.msra.mxu0 0
  %590 = vmatprep.subr.bf16.mxu0 0
  %591 = vmatpush1.bf16.msra.mxu0 0
  %592 = vmatprep.subr.bf16.mxu0 0
  %593 = vmatpush1.bf16.msra.mxu0 0
  %594 = vmatprep.subr.bf16.mxu0 0
  %595 = vmatpush1.bf16.msra.mxu0 0
  %596 = vmatprep.subr.bf16.mxu0 0
  %597 = vmatpush1.bf16.msra.mxu0 0
  %598 = vmatprep.subr.bf16.mxu0 0
  %599 = vmatpush1.bf16.msra.mxu0 0
  %600 = vmatprep.subr.bf16.mxu0 0
  %601 = vmatpush1.bf16.msra.mxu0 0
  %602 = vmatprep.subr.bf16.mxu0 0
  %603 = vmatpush1.bf16.msra.mxu0 0
  %604 = vmatprep.subr.bf16.mxu0 0
  %605 = vmatpush1.bf16.msra.mxu0 0
  %606 = vmatprep.subr.bf16.mxu0 0
  %607 = vmatpush1.bf16.msra.mxu0 0
  %608 = vmatprep.subr.bf16.mxu0 0
  %609 = vmatpush1.bf16.msra.mxu0 0
  %610 = vmatprep.mubr.bf16.mxu0 0
  %611 = vmatmul.mubr.bf16.gmra.mrb[0].mxu0 %v576
  %v612 = vpop.f32.mrb[0].mxu0
  %v613 = vadd.f32 %v561, %v612
  %v614 = vpop.f32.mrb[0].mxu0
  %v615 = vpop.f32.mrb[0].mxu0
  %v616 = vpop.f32.mrb[0].mxu0
  %617 = vdwg.mxu0
  %v618 = vmax.f32 %v613, 0.0
  %s619 = scalar_lea.vmem %s7, 64
  %v620 = vld [vmem:[%s619] sm:$0xf]
  %v621 = vld [vmem:[%s619 + $0x4] sm:$0xf]
  %v622 = vld [vmem:[%s619 + $0x8] sm:$0xf]
  %v623 = vld [vmem:[%s619 + $0xc] sm:$0xf]
  %v624 = vld [vmem:[%s619 + $0x10] sm:$0xf]
  %v625 = vld [vmem:[%s619 + $0x14] sm:$0xf]
  %v626 = vld [vmem:[%s619 + $0x18] sm:$0xf]
  %v627 = vld [vmem:[%s619 + $0x1c] sm:$0xf]
  %s628 = scalar_lea.vmem %s8, 2
  %v629 = vld [vmem:[%s628] sm:$0x1]
  %v630 = vpack.c.bf16 %v618, %v618
  %v632 = vlaneseq
  %v633 = vshrl.u32 %v632, 7
  %v634 = vsub.s32 0, %v633
  %v635 = vrot.slane %v629, %v634
  %v645 = vunpack.c.l.b16 %v620
  %v646 = vunpack.c.l.b16 %v621
  %v647 = vunpack.c.l.b16 %v622
  %v648 = vunpack.c.l.b16 %v623
  %v649 = vunpack.c.l.b16 %v624
  %v650 = vunpack.c.l.b16 %v625
  %v651 = vunpack.c.l.b16 %v626
  %v652 = vunpack.c.l.b16 %v627
  %v653 = vpack.c.b16 %v646, %v645
  %v654 = vpack.c.b16 %v648, %v647
  %v655 = vpack.c.b16 %v650, %v649
  %v656 = vpack.c.b16 %v652, %v651
  %v662 = vsel %vm206, %v630, 0
  %664 = vmatprep.subr.bf16.mxu0 0
  %665 = vmatpush1.bf16.msra.mxu0 %v653
  %666 = vmatprep.subr.bf16.mxu0 0
  %667 = vmatpush1.bf16.msra.mxu0 %v654
  %668 = vmatprep.subr.bf16.mxu0 0
  %669 = vmatpush1.bf16.msra.mxu0 %v655
  %670 = vmatprep.subr.bf16.mxu0 0
  %671 = vmatpush1.bf16.msra.mxu0 %v656
  %672 = vmatprep.subr.bf16.mxu0 0
  %673 = vmatpush1.bf16.msra.mxu0 0
  %674 = vmatprep.subr.bf16.mxu0 0
  %675 = vmatpush1.bf16.msra.mxu0 0
  %676 = vmatprep.subr.bf16.mxu0 0
  %677 = vmatpush1.bf16.msra.mxu0 0
  %678 = vmatprep.subr.bf16.mxu0 0
  %679 = vmatpush1.bf16.msra.mxu0 0
  %680 = vmatprep.subr.bf16.mxu0 0
  %681 = vmatpush1.bf16.msra.mxu0 0
  %682 = vmatprep.subr.bf16.mxu0 0
  %683 = vmatpush1.bf16.msra.mxu0 0
  %684 = vmatprep.subr.bf16.mxu0 0
  %685 = vmatpush1.bf16.msra.mxu0 0
  %686 = vmatprep.subr.bf16.mxu0 0
  %687 = vmatpush1.bf16.msra.mxu0 0
  %688 = vmatprep.subr.bf16.mxu0 0
  %689 = vmatpush1.bf16.msra.mxu0 0
  %690 = vmatprep.subr.bf16.mxu0 0
  %691 = vmatpush1.bf16.msra.mxu0 0
  %692 = vmatprep.subr.bf16.mxu0 0
  %693 = vmatpush1.bf16.msra.mxu0 0
  %694 = vmatprep.subr.bf16.mxu0 0
  %695 = vmatpush1.bf16.msra.mxu0 0
  %696 = vmatprep.mubr.bf16.mxu0 0
  %697 = vmatmul.mubr.bf16.gmra.mrb[0].mxu0 %v662
  %v698 = vpop.f32.mrb[0].mxu0
  %v699 = vadd.f32 %v635, %v698
  %v700 = vpop.f32.mrb[0].mxu0
  %v701 = vpop.f32.mrb[0].mxu0
  %v702 = vpop.f32.mrb[0].mxu0
  %703 = vdwg.mxu0
  %v704 = vmul.f32 %v699, %v34
  %v705 = vadd.f32 %v480, %v704
  %v706 = vmul.f32 %v699, %v254
  %708 = vrot.lane.b32.xlu0 %v706, 120
  %v709 = vpop.permute.xlu0 %708
  %v711 = vsub.f32 %v486, %v709
  %s712 = scalar_lea.vmem %s3, 24
  %v713 = vld [vmem:[%s712] sm:$0xf]
  %v714 = vld [vmem:[%s712 + $0x4] sm:$0xf]
  %s715 = scalar_lea.vmem %s4, 3
  %v716 = vld [vmem:[%s715] sm:$0x1]
  %v717 = vpack.c.bf16 %v711, %v711
  %v719 = vlaneseq
  %v720 = vshrl.u32 %v719, 7
  %v721 = vsub.s32 0, %v720
  %v722 = vrot.slane %v716, %v721
  %v726 = vunpack.c.l.b16 %v713
  %v727 = vunpack.c.l.b16 %v714
  %v728 = vpack.c.b16 %v727, %v726
  %v731 = vsel %vm52, %v717, 0
  %733 = vmatprep.subr.bf16.mxu0 0
  %734 = vmatpush1.bf16.msra.mxu0 %v728
  %735 = vmatprep.subr.bf16.mxu0 0
  %736 = vmatpush1.bf16.msra.mxu0 0
  %737 = vmatprep.subr.bf16.mxu0 0
  %738 = vmatpush1.bf16.msra.mxu0 0
  %739 = vmatprep.subr.bf16.mxu0 0
  %740 = vmatpush1.bf16.msra.mxu0 0
  %741 = vmatprep.subr.bf16.mxu0 0
  %742 = vmatpush1.bf16.msra.mxu0 0
  %743 = vmatprep.subr.bf16.mxu0 0
  %744 = vmatpush1.bf16.msra.mxu0 0
  %745 = vmatprep.subr.bf16.mxu0 0
  %746 = vmatpush1.bf16.msra.mxu0 0
  %747 = vmatprep.subr.bf16.mxu0 0
  %748 = vmatpush1.bf16.msra.mxu0 0
  %749 = vmatprep.subr.bf16.mxu0 0
  %750 = vmatpush1.bf16.msra.mxu0 0
  %751 = vmatprep.subr.bf16.mxu0 0
  %752 = vmatpush1.bf16.msra.mxu0 0
  %753 = vmatprep.subr.bf16.mxu0 0
  %754 = vmatpush1.bf16.msra.mxu0 0
  %755 = vmatprep.subr.bf16.mxu0 0
  %756 = vmatpush1.bf16.msra.mxu0 0
  %757 = vmatprep.subr.bf16.mxu0 0
  %758 = vmatpush1.bf16.msra.mxu0 0
  %759 = vmatprep.subr.bf16.mxu0 0
  %760 = vmatpush1.bf16.msra.mxu0 0
  %761 = vmatprep.subr.bf16.mxu0 0
  %762 = vmatpush1.bf16.msra.mxu0 0
  %763 = vmatprep.subr.bf16.mxu0 0
  %764 = vmatpush1.bf16.msra.mxu0 0
  %765 = vmatprep.mubr.bf16.mxu0 0
  %766 = vmatmul.mubr.bf16.gmra.mrb[0].mxu0 %v731
  %v767 = vpop.f32.mrb[0].mxu0
  %v768 = vadd.f32 %v722, %v767
  %v769 = vpop.f32.mrb[0].mxu0
  %v770 = vpop.f32.mrb[0].mxu0
  %v771 = vpop.f32.mrb[0].mxu0
  %772 = vdwg.mxu0
  %v773 = vmax.f32 %v768, 0.0
  %s774 = scalar_lea.vmem %s5, 48
  %v775 = vld [vmem:[%s774] sm:$0xf]
  %v776 = vld [vmem:[%s774 + $0x4] sm:$0xf]
  %v777 = vld [vmem:[%s774 + $0x8] sm:$0xf]
  %v778 = vld [vmem:[%s774 + $0xc] sm:$0xf]
  %s779 = scalar_lea.vmem %s6, 3
  %v780 = vld [vmem:[%s779] sm:$0x1]
  %v781 = vpack.c.bf16 %v773, %v773
  %v783 = vlaneseq
  %v784 = vshrl.u32 %v783, 7
  %v785 = vsub.s32 0, %v784
  %v786 = vrot.slane %v780, %v785
  %v792 = vunpack.c.l.b16 %v775
  %v793 = vunpack.c.l.b16 %v776
  %v794 = vunpack.c.l.b16 %v777
  %v795 = vunpack.c.l.b16 %v778
  %v796 = vpack.c.b16 %v793, %v792
  %v797 = vpack.c.b16 %v795, %v794
  %v801 = vsel %vm121, %v781, 0
  %803 = vmatprep.subr.bf16.mxu0 0
  %804 = vmatpush1.bf16.msra.mxu0 %v796
  %805 = vmatprep.subr.bf16.mxu0 0
  %806 = vmatpush1.bf16.msra.mxu0 %v797
  %807 = vmatprep.subr.bf16.mxu0 0
  %808 = vmatpush1.bf16.msra.mxu0 0
  %809 = vmatprep.subr.bf16.mxu0 0
  %810 = vmatpush1.bf16.msra.mxu0 0
  %811 = vmatprep.subr.bf16.mxu0 0
  %812 = vmatpush1.bf16.msra.mxu0 0
  %813 = vmatprep.subr.bf16.mxu0 0
  %814 = vmatpush1.bf16.msra.mxu0 0
  %815 = vmatprep.subr.bf16.mxu0 0
  %816 = vmatpush1.bf16.msra.mxu0 0
  %817 = vmatprep.subr.bf16.mxu0 0
  %818 = vmatpush1.bf16.msra.mxu0 0
  %819 = vmatprep.subr.bf16.mxu0 0
  %820 = vmatpush1.bf16.msra.mxu0 0
  %821 = vmatprep.subr.bf16.mxu0 0
  %822 = vmatpush1.bf16.msra.mxu0 0
  %823 = vmatprep.subr.bf16.mxu0 0
  %824 = vmatpush1.bf16.msra.mxu0 0
  %825 = vmatprep.subr.bf16.mxu0 0
  %826 = vmatpush1.bf16.msra.mxu0 0
  %827 = vmatprep.subr.bf16.mxu0 0
  %828 = vmatpush1.bf16.msra.mxu0 0
  %829 = vmatprep.subr.bf16.mxu0 0
  %830 = vmatpush1.bf16.msra.mxu0 0
  %831 = vmatprep.subr.bf16.mxu0 0
  %832 = vmatpush1.bf16.msra.mxu0 0
  %833 = vmatprep.subr.bf16.mxu0 0
  %834 = vmatpush1.bf16.msra.mxu0 0
  %835 = vmatprep.mubr.bf16.mxu0 0
  %836 = vmatmul.mubr.bf16.gmra.mrb[0].mxu0 %v801
  %v837 = vpop.f32.mrb[0].mxu0
  %v838 = vadd.f32 %v786, %v837
  %v839 = vpop.f32.mrb[0].mxu0
  %v840 = vpop.f32.mrb[0].mxu0
  %v841 = vpop.f32.mrb[0].mxu0
  %842 = vdwg.mxu0
  %v843 = vmax.f32 %v838, 0.0
  %s844 = scalar_lea.vmem %s7, 96
  %v845 = vld [vmem:[%s844] sm:$0xf]
  %v846 = vld [vmem:[%s844 + $0x4] sm:$0xf]
  %v847 = vld [vmem:[%s844 + $0x8] sm:$0xf]
  %v848 = vld [vmem:[%s844 + $0xc] sm:$0xf]
  %v849 = vld [vmem:[%s844 + $0x10] sm:$0xf]
  %v850 = vld [vmem:[%s844 + $0x14] sm:$0xf]
  %v851 = vld [vmem:[%s844 + $0x18] sm:$0xf]
  %v852 = vld [vmem:[%s844 + $0x1c] sm:$0xf]
  %s853 = scalar_lea.vmem %s8, 3
  %v854 = vld [vmem:[%s853] sm:$0x1]
  %v855 = vpack.c.bf16 %v843, %v843
  %v857 = vlaneseq
  %v858 = vshrl.u32 %v857, 7
  %v859 = vsub.s32 0, %v858
  %v860 = vrot.slane %v854, %v859
  %v870 = vunpack.c.l.b16 %v845
  %v871 = vunpack.c.l.b16 %v846
  %v872 = vunpack.c.l.b16 %v847
  %v873 = vunpack.c.l.b16 %v848
  %v874 = vunpack.c.l.b16 %v849
  %v875 = vunpack.c.l.b16 %v850
  %v876 = vunpack.c.l.b16 %v851
  %v877 = vunpack.c.l.b16 %v852
  %v878 = vpack.c.b16 %v871, %v870
  %v879 = vpack.c.b16 %v873, %v872
  %v880 = vpack.c.b16 %v875, %v874
  %v881 = vpack.c.b16 %v877, %v876
  %v887 = vsel %vm206, %v855, 0
  %889 = vmatprep.subr.bf16.mxu0 0
  %890 = vmatpush1.bf16.msra.mxu0 %v878
  %891 = vmatprep.subr.bf16.mxu0 0
  %892 = vmatpush1.bf16.msra.mxu0 %v879
  %893 = vmatprep.subr.bf16.mxu0 0
  %894 = vmatpush1.bf16.msra.mxu0 %v880
  %895 = vmatprep.subr.bf16.mxu0 0
  %896 = vmatpush1.bf16.msra.mxu0 %v881
  %897 = vmatprep.subr.bf16.mxu0 0
  %898 = vmatpush1.bf16.msra.mxu0 0
  %899 = vmatprep.subr.bf16.mxu0 0
  %900 = vmatpush1.bf16.msra.mxu0 0
  %901 = vmatprep.subr.bf16.mxu0 0
  %902 = vmatpush1.bf16.msra.mxu0 0
  %903 = vmatprep.subr.bf16.mxu0 0
  %904 = vmatpush1.bf16.msra.mxu0 0
  %905 = vmatprep.subr.bf16.mxu0 0
  %906 = vmatpush1.bf16.msra.mxu0 0
  %907 = vmatprep.subr.bf16.mxu0 0
  %908 = vmatpush1.bf16.msra.mxu0 0
  %909 = vmatprep.subr.bf16.mxu0 0
  %910 = vmatpush1.bf16.msra.mxu0 0
  %911 = vmatprep.subr.bf16.mxu0 0
  %912 = vmatpush1.bf16.msra.mxu0 0
  %913 = vmatprep.subr.bf16.mxu0 0
  %914 = vmatpush1.bf16.msra.mxu0 0
  %915 = vmatprep.subr.bf16.mxu0 0
  %916 = vmatpush1.bf16.msra.mxu0 0
  %917 = vmatprep.subr.bf16.mxu0 0
  %918 = vmatpush1.bf16.msra.mxu0 0
  %919 = vmatprep.subr.bf16.mxu0 0
  %920 = vmatpush1.bf16.msra.mxu0 0
  %921 = vmatprep.mubr.bf16.mxu0 0
  %922 = vmatmul.mubr.bf16.gmra.mrb[0].mxu0 %v887
  %v923 = vpop.f32.mrb[0].mxu0
  %v924 = vadd.f32 %v860, %v923
  %v925 = vpop.f32.mrb[0].mxu0
  %v926 = vpop.f32.mrb[0].mxu0
  %v927 = vpop.f32.mrb[0].mxu0
  %928 = vdwg.mxu0
  %v929 = vmul.f32 %v924, %v34
  %v930 = vadd.f32 %v705, %v929
  %vm931 = vcmask 64512
  %932 = vst.msk [vmem:[%s9] sm:$0xff] %vm931, %v930
  // Predicated region
  $region38: #{nbeats_pallas.1} parent=0 // pred_check
    _
  $region39: #{nbeats_pallas.1} parent=0 // pred_check_branch
    %934 = sbr.rel (0) target = $region41
  $region40: #{nbeats_pallas.1} parent=0 // pred_region
    _
  $region41: #{nbeats_pallas.1} parent=0 // pred_fallthru
    _
  // Predicated region
  $region42: #{nbeats_pallas.1} parent=0 // pred_check
    _
  $region43: #{nbeats_pallas.1} parent=0 // pred_check_branch
    %936 = sbr.rel (0) target = $region45
  $region44: #{nbeats_pallas.1} parent=0 // pred_region
    _
  $region45: #{nbeats_pallas.1} parent=0 // pred_fallthru
    _

</llo_original>
